<compile_context>
chip_gen: v6e
topology: v6e:2x2x1
jax: 0.10.0
libtpu: 0.0.40
codegen_flags: <defaults>
</compile_context>

<pallas_src>
import functools

import jax
import jax.numpy as jnp
from jax import lax
from jax.experimental import pallas as pl
from jax.experimental.pallas import tpu as pltpu


def _round_up(v, m):
    return (v + m - 1) // m * m


def _pick_nb(n, hwp, lane_target=2048):
    """Largest divisor of n keeping Nb*HWp within a modest lane budget."""
    best = 1
    cap = max(lane_target, hwp)
    for nb in range(1, n + 1):
        if n % nb == 0 and nb * hwp <= cap:
            best = nb
    return best


def _block_gdiff_kernel(x_ref, w_ref, prm_ref, msk_ref, o_ref, slab_ref, *,
                        W, HW, HWp, Nb, Cpad, eps):
    # x_ref   : (Nb, Cpad, HWp)   Nb samples; channels on sublanes, space on lanes
    # w_ref   : (Cout, 9*Cpad)    fused im2col weights (zero in padded channel slots)
    # prm_ref : (Cout, 3)         [:,0]=bias, [:,1]=gamma, [:,2]=beta
    # msk_ref : (10, HWp)         rows 0..8: per-tap 0/1 boundary masks (also zero in
    #                             the lane-padding region); row 9: valid-lane mask
    # o_ref   : (Nb, Cout, HWp)
    # slab_ref: (9*Cpad, Nb*HWp)  VMEM scratch holding the im2col slab
    masks = msk_ref[...]                                         # (10, HWp)

    # Build the im2col slab. Tap t = kh*3 + kw of sample s occupies
    # rows [t*Cpad, (t+1)*Cpad), lanes [s*HWp, (s+1)*HWp).
    for s in range(Nb):
        x = x_ref[s]                                             # (Cpad, HWp)
        for kh in range(3):
            dh = kh - 1
            for kw in range(3):
                dw = kw - 1
                t = kh * 3 + kw
                if dh == 0 and dw == 0:
                    tap = x                                      # center tap: no shift
                else:
                    shift = (-(dh * W + dw)) % HWp               # static positive shift
                    shifted = pltpu.roll(x, shift=shift, axis=1)  # XLU lane rotation
                    tap = shifted * masks[t:t + 1, :]            # zero wrapped taps
                slab_ref[t * Cpad:(t + 1) * Cpad,
                         s * HWp:(s + 1) * HWp] = tap

    # One fused MXU matmul: (Cout, 9*Cpad) x (9*Cpad, Nb*HWp) -> (Cout, Nb*HWp) f32.
    conv = jnp.dot(w_ref[...], slab_ref[...], preferred_element_type=jnp.float32)
    conv = conv + prm_ref[:, 0:1].astype(jnp.float32)            # bias, bcast on lanes

    Cout = o_ref.shape[1]
    inv_n = 1.0 / float(Cout * HW)                               # valid elements only
    gamma = prm_ref[:, 1:2].astype(jnp.float32)
    beta = prm_ref[:, 2:3].astype(jnp.float32)
    valid = masks[9:10, :].astype(jnp.float32)                   # (1, HWp)

    # GroupNorm(num_groups=1) per sample: two-pass mean / centered variance in f32.
    for s in range(Nb):
        c = conv[:, s * HWp:(s + 1) * HWp]                       # (Cout, HWp)
        mean = jnp.sum(c * valid) * inv_n
        centered = (c - mean) * valid
        var = jnp.sum(centered * centered) * inv_n
        inv_std = lax.rsqrt(var + eps)
        y = (c - mean) * inv_std * gamma + beta
        # SiLU; Dropout2d is identity in eval mode.
        y = y * jax.nn.sigmoid(y)
        o_ref[s] = y.astype(o_ref.dtype)                         # lane-dense store


@functools.partial(jax.jit, static_argnames=("eps",))
def block_gdiff_2d(x_nchw, weight_oihw, bias, gamma, beta, *, eps=1e-5):
    """Forward pass of BlockGDiff2D. x_nchw: (N, Cin, H, W) -> (N, Cout, H, W)."""
    N, Cin, H, W = x_nchw.shape
    Cout = weight_oihw.shape[0]
    HW = H * W
    Cpad = _round_up(Cin, 8)           # TODO(synk): 16 for bf16 sublane packing
    HWp = _round_up(HW, 128)           # lane-dense stores / rolls
    Nb = _pick_nb(N, HWp)              # samples per grid step (lane-concatenated)

    # Free reshape + zero pad (channels -> Cpad, lanes -> HWp) in the wrapper so the
    # kernel's per-tap slab writes are whole-(8,128)-tile aligned stores.
    x_flat = x_nchw.reshape(N, Cin, HW)
    x_flat = jnp.pad(x_flat, ((0, 0), (0, Cpad - Cin), (0, HWp - HW)))

    # Fused im2col weights: (Cout, Cin, 3, 3) -> (Cout, 3, 3, Cpad) -> (Cout, 9*Cpad),
    # column index = (kh*3 + kw)*Cpad + c, zero-filled for padded channel slots.
    w_t = jnp.transpose(weight_oihw, (0, 2, 3, 1))
    w_t = jnp.pad(w_t, ((0, 0), (0, 0), (0, 0), (0, Cpad - Cin)))
    w2 = w_t.reshape(Cout, 9 * Cpad)

    # Pack bias/gamma/beta as one (Cout, 3) array -> single small constant-index DMA.
    params = jnp.stack([bias, gamma, beta], axis=1)

    # Precomputed 0/1 masks: rows 0..8 = per-tap boundary masks (zero also in the lane
    # padding), row 9 = valid-lane mask used to exclude padding from GroupNorm sums.
    hh = jnp.arange(H)
    ww = jnp.arange(W)
    mask_rows = []
    for kh in range(3):
        dh = kh - 1
        for kw in range(3):
            dw = kw - 1
            mh = (hh + dh >= 0) & (hh + dh < H)
            mw = (ww + dw >= 0) & (ww + dw < W)
            m = (mh[:, None] & mw[None, :]).reshape(HW)
            mask_rows.append(jnp.pad(m, (0, HWp - HW)))
    mask_rows.append(jnp.arange(HWp) < HW)
    masks = jnp.stack(mask_rows, axis=0).astype(x_nchw.dtype)    # (10, HWp)

    kernel = functools.partial(_block_gdiff_kernel,
                               W=W, HW=HW, HWp=HWp, Nb=Nb, Cpad=Cpad, eps=eps)

    # Size the VMEM limit from actual need (double-buffered blocks + slab + consts +
    # live conv), clamped so it stays under v7x's 64 MiB physical VMEM.
    dsz = x_nchw.dtype.itemsize
    need = (2 * (Nb * Cpad * HWp + Nb * Cout * HWp) * dsz
            + 9 * Cpad * Nb * HWp * dsz
            + Cout * 9 * Cpad * dsz + 10 * HWp * 4
            + Cout * Nb * HWp * 4)
    vmem_limit = int(min(max(2 * need, 32 * 1024 * 1024), 48 * 1024 * 1024))

    out_flat = pl.pallas_call(
        kernel,
        out_shape=jax.ShapeDtypeStruct((N, Cout, HWp), x_nchw.dtype),
        grid_spec=pltpu.PrefetchScalarGridSpec(
            num_scalar_prefetch=0,
            grid=(N // Nb,),
            in_specs=[
                pl.BlockSpec((Nb, Cpad, HWp), lambda g: (g, 0, 0)),
                pl.BlockSpec((Cout, 9 * Cpad), lambda g: (0, 0)),
                pl.BlockSpec((Cout, 3), lambda g: (0, 0)),
                pl.BlockSpec((10, HWp), lambda g: (0, 0)),
            ],
            out_specs=pl.BlockSpec((Nb, Cout, HWp), lambda g: (g, 0, 0)),
            scratch_shapes=[pltpu.VMEM((9 * Cpad, Nb * HWp), x_nchw.dtype)],
        ),
        compiler_params=pltpu.CompilerParams(
            dimension_semantics=("parallel",),
            vmem_limit_bytes=vmem_limit,
        ),
    )(x_flat, w2, params, masks)

    # Drop lane padding (no-op when HW is 128-aligned); free reshape back to NCHW.
    if HWp != HW:
        out_flat = out_flat[..., :HW]
    return out_flat.reshape(N, Cout, H, W)


def _reference(x_nchw, weight_oihw, bias, gamma, beta, eps=1e-5):
    """Pure-JAX reference matching PyTorch semantics (eval mode)."""
    y = lax.conv_general_dilated(
        x_nchw, weight_oihw, window_strides=(1, 1), padding=((1, 1), (1, 1)),
        dimension_numbers=("NCHW", "OIHW", "NCHW"))
    y = y + bias.reshape(1, -1, 1, 1)
    mean = jnp.mean(y, axis=(1, 2, 3), keepdims=True)
    var = jnp.mean((y - mean) ** 2, axis=(1, 2, 3), keepdims=True)
    y = (y - mean) / jnp.sqrt(var + eps)
    y = y * gamma.reshape(1, -1, 1, 1) + beta.reshape(1, -1, 1, 1)
    return y * jax.nn.sigmoid(y)


if __name__ == "__main__":
    key = jax.random.PRNGKey(0)
    N, Cin, Cout, H, W = 2, 4, 8, 16, 16

    k1, k2, k3, k4, k5 = jax.random.split(key, 5)
    x = jax.random.normal(k1, (N, Cin, H, W), jnp.float32)

    # Deterministic "PyTorch-like" parameter init.
    fan_in = Cin * 3 * 3
    bound = 1.0 / (fan_in ** 0.5)
    weight = jax.random.uniform(k2, (Cout, Cin, 3, 3), jnp.float32, -bound, bound)
    bias = jax.random.uniform(k3, (Cout,), jnp.float32, -bound, bound)
    gamma = 1.0 + 0.1 * jax.random.normal(k4, (Cout,), jnp.float32)
    beta = 0.1 * jax.random.normal(k5, (Cout,), jnp.float32)

    out = block_gdiff_2d(x, weight, bias, gamma, beta)
    out = jax.block_until_ready(out)

    ref = jax.block_until_ready(_reference(x, weight, bias, gamma, beta))
    assert out.shape == (N, Cout, H, W)
    # Multi-sample (Nb=2 lane-concatenated) correctness check against the reference.
    assert jnp.max(jnp.abs(out - ref)) < 1e-4, "mismatch vs reference"

    print("KERNEL_OK")
</pallas_src>

<mosaic_0001>
module attributes {stable_mosaic.version = 11 : i64} {
  func.func @_block_gdiff_kernel(%arg0: i32, %arg1: memref<2x8x256xf32, #tpu.memory_space<vmem>>, %arg2: memref<8x72xf32, #tpu.memory_space<vmem>>, %arg3: memref<8x3xf32, #tpu.memory_space<vmem>>, %arg4: memref<10x256xf32, #tpu.memory_space<vmem>>, %arg5: memref<2x8x256xf32, #tpu.memory_space<vmem>>, %arg6: memref<72x512xf32, #tpu.memory_space<vmem>>) attributes {dimension_semantics = [#tpu.dimension_semantics<parallel>], iteration_bounds = array<i64: 1>, scalar_prefetch = 0 : i64, scratch_operands = 1 : i64, tpu.core_type = #tpu.core_type<tc>, window_params = [{transform_indices = @transform_0, window_bounds = array<i64: 2, 8, 256>}, {pipeline_mode = #tpu.pipeline_mode<synchronous>, transform_indices = @transform_1, window_bounds = array<i64: 8, 72>}, {pipeline_mode = #tpu.pipeline_mode<synchronous>, transform_indices = @transform_2, window_bounds = array<i64: 8, 3>}, {pipeline_mode = #tpu.pipeline_mode<synchronous>, transform_indices = @transform_3, window_bounds = array<i64: 10, 256>}, {transform_indices = @transform_4, window_bounds = array<i64: 2, 8, 256>}]} {
    %c0 = arith.constant 0 : index
    %c0_0 = arith.constant 0 : index
    %0 = vector.load %arg4[%c0, %c0_0] : memref<10x256xf32, #tpu.memory_space<vmem>>, vector<10x256xf32>
    %c0_1 = arith.constant 0 : index
    %c0_2 = arith.constant 0 : index
    %c0_3 = arith.constant 0 : index
    %1 = vector.load %arg1[%c0_1, %c0_2, %c0_3] : memref<2x8x256xf32, #tpu.memory_space<vmem>>, vector<1x8x256xf32>
    %2 = vector.shape_cast %1 : vector<1x8x256xf32> to vector<8x256xf32>
    %c17_i32 = arith.constant 17 : i32
    %3 = tpu.dynamic_rotate %2 by %c17_i32 dim 1 : vector<8x256xf32>, i32 -> vector<8x256xf32>
    %4 = vector.extract_strided_slice %0 {offsets = [0, 0], sizes = [1, 256], strides = [1, 1]} : vector<10x256xf32> to vector<1x256xf32>
    %5 = vector.broadcast %4 : vector<1x256xf32> to vector<8x256xf32>
    %6 = arith.mulf %3, %5 : vector<8x256xf32>
    %c0_4 = arith.constant 0 : index
    %c0_5 = arith.constant 0 : index
    %7 = vector.load %arg6[%c0_4, %c0_5] : memref<72x512xf32, #tpu.memory_space<vmem>>, vector<8x256xf32>
    tpu.vector_store %arg6[%c0_4, %c0_5], %6 {strides = array<i32>} : memref<72x512xf32, #tpu.memory_space<vmem>>, vector<8x256xf32>,
    %c16_i32 = arith.constant 16 : i32
    %8 = tpu.dynamic_rotate %2 by %c16_i32 dim 1 : vector<8x256xf32>, i32 -> vector<8x256xf32>
    %9 = vector.extract_strided_slice %0 {offsets = [1, 0], sizes = [1, 256], strides = [1, 1]} : vector<10x256xf32> to vector<1x256xf32>
    %10 = vector.broadcast %9 : vector<1x256xf32> to vector<8x256xf32>
    %11 = arith.mulf %8, %10 : vector<8x256xf32>
    %c8 = arith.constant 8 : index
    %c0_6 = arith.constant 0 : index
    %12 = vector.load %arg6[%c8, %c0_6] : memref<72x512xf32, #tpu.memory_space<vmem>>, vector<8x256xf32>
    tpu.vector_store %arg6[%c8, %c0_6], %11 {strides = array<i32>} : memref<72x512xf32, #tpu.memory_space<vmem>>, vector<8x256xf32>,
    %c15_i32 = arith.constant 15 : i32
    %13 = tpu.dynamic_rotate %2 by %c15_i32 dim 1 : vector<8x256xf32>, i32 -> vector<8x256xf32>
    %14 = vector.extract_strided_slice %0 {offsets = [2, 0], sizes = [1, 256], strides = [1, 1]} : vector<10x256xf32> to vector<1x256xf32>
    %15 = vector.broadcast %14 : vector<1x256xf32> to vector<8x256xf32>
    %16 = arith.mulf %13, %15 : vector<8x256xf32>
    %c16 = arith.constant 16 : index
    %c0_7 = arith.constant 0 : index
    %17 = vector.load %arg6[%c16, %c0_7] : memref<72x512xf32, #tpu.memory_space<vmem>>, vector<8x256xf32>
    tpu.vector_store %arg6[%c16, %c0_7], %16 {strides = array<i32>} : memref<72x512xf32, #tpu.memory_space<vmem>>, vector<8x256xf32>,
    %c1_i32 = arith.constant 1 : i32
    %18 = tpu.dynamic_rotate %2 by %c1_i32 dim 1 : vector<8x256xf32>, i32 -> vector<8x256xf32>
    %19 = vector.extract_strided_slice %0 {offsets = [3, 0], sizes = [1, 256], strides = [1, 1]} : vector<10x256xf32> to vector<1x256xf32>
    %20 = vector.broadcast %19 : vector<1x256xf32> to vector<8x256xf32>
    %21 = arith.mulf %18, %20 : vector<8x256xf32>
    %c24 = arith.constant 24 : index
    %c0_8 = arith.constant 0 : index
    %22 = vector.load %arg6[%c24, %c0_8] : memref<72x512xf32, #tpu.memory_space<vmem>>, vector<8x256xf32>
    tpu.vector_store %arg6[%c24, %c0_8], %21 {strides = array<i32>} : memref<72x512xf32, #tpu.memory_space<vmem>>, vector<8x256xf32>,
    %c32 = arith.constant 32 : index
    %c0_9 = arith.constant 0 : index
    %23 = vector.load %arg6[%c32, %c0_9] : memref<72x512xf32, #tpu.memory_space<vmem>>, vector<8x256xf32>
    tpu.vector_store %arg6[%c32, %c0_9], %2 {strides = array<i32>} : memref<72x512xf32, #tpu.memory_space<vmem>>, vector<8x256xf32>,
    %c255_i32 = arith.constant 255 : i32
    %24 = tpu.dynamic_rotate %2 by %c255_i32 dim 1 : vector<8x256xf32>, i32 -> vector<8x256xf32>
    %25 = vector.extract_strided_slice %0 {offsets = [5, 0], sizes = [1, 256], strides = [1, 1]} : vector<10x256xf32> to vector<1x256xf32>
    %26 = vector.broadcast %25 : vector<1x256xf32> to vector<8x256xf32>
    %27 = arith.mulf %24, %26 : vector<8x256xf32>
    %c40 = arith.constant 40 : index
    %c0_10 = arith.constant 0 : index
    %28 = vector.load %arg6[%c40, %c0_10] : memref<72x512xf32, #tpu.memory_space<vmem>>, vector<8x256xf32>
    tpu.vector_store %arg6[%c40, %c0_10], %27 {strides = array<i32>} : memref<72x512xf32, #tpu.memory_space<vmem>>, vector<8x256xf32>,
    %c241_i32 = arith.constant 241 : i32
    %29 = tpu.dynamic_rotate %2 by %c241_i32 dim 1 : vector<8x256xf32>, i32 -> vector<8x256xf32>
    %30 = vector.extract_strided_slice %0 {offsets = [6, 0], sizes = [1, 256], strides = [1, 1]} : vector<10x256xf32> to vector<1x256xf32>
    %31 = vector.broadcast %30 : vector<1x256xf32> to vector<8x256xf32>
    %32 = arith.mulf %29, %31 : vector<8x256xf32>
    %c48 = arith.constant 48 : index
    %c0_11 = arith.constant 0 : index
    %33 = vector.load %arg6[%c48, %c0_11] : memref<72x512xf32, #tpu.memory_space<vmem>>, vector<8x256xf32>
    tpu.vector_store %arg6[%c48, %c0_11], %32 {strides = array<i32>} : memref<72x512xf32, #tpu.memory_space<vmem>>, vector<8x256xf32>,
    %c240_i32 = arith.constant 240 : i32
    %34 = tpu.dynamic_rotate %2 by %c240_i32 dim 1 : vector<8x256xf32>, i32 -> vector<8x256xf32>
    %35 = vector.extract_strided_slice %0 {offsets = [7, 0], sizes = [1, 256], strides = [1, 1]} : vector<10x256xf32> to vector<1x256xf32>
    %36 = vector.broadcast %35 : vector<1x256xf32> to vector<8x256xf32>
    %37 = arith.mulf %34, %36 : vector<8x256xf32>
    %c56 = arith.constant 56 : index
    %c0_12 = arith.constant 0 : index
    %38 = vector.load %arg6[%c56, %c0_12] : memref<72x512xf32, #tpu.memory_space<vmem>>, vector<8x256xf32>
    tpu.vector_store %arg6[%c56, %c0_12], %37 {strides = array<i32>} : memref<72x512xf32, #tpu.memory_space<vmem>>, vector<8x256xf32>,
    %c239_i32 = arith.constant 239 : i32
    %39 = tpu.dynamic_rotate %2 by %c239_i32 dim 1 : vector<8x256xf32>, i32 -> vector<8x256xf32>
    %40 = vector.extract_strided_slice %0 {offsets = [8, 0], sizes = [1, 256], strides = [1, 1]} : vector<10x256xf32> to vector<1x256xf32>
    %41 = vector.broadcast %40 : vector<1x256xf32> to vector<8x256xf32>
    %42 = arith.mulf %39, %41 : vector<8x256xf32>
    %c64 = arith.constant 64 : index
    %c0_13 = arith.constant 0 : index
    %43 = vector.load %arg6[%c64, %c0_13] : memref<72x512xf32, #tpu.memory_space<vmem>>, vector<8x256xf32>
    tpu.vector_store %arg6[%c64, %c0_13], %42 {strides = array<i32>} : memref<72x512xf32, #tpu.memory_space<vmem>>, vector<8x256xf32>,
    %c1 = arith.constant 1 : index
    %c0_14 = arith.constant 0 : index
    %c0_15 = arith.constant 0 : index
    %44 = vector.load %arg1[%c1, %c0_14, %c0_15] : memref<2x8x256xf32, #tpu.memory_space<vmem>>, vector<1x8x256xf32>
    %45 = vector.shape_cast %44 : vector<1x8x256xf32> to vector<8x256xf32>
    %c17_i32_16 = arith.constant 17 : i32
    %46 = tpu.dynamic_rotate %45 by %c17_i32_16 dim 1 : vector<8x256xf32>, i32 -> vector<8x256xf32>
    %47 = vector.extract_strided_slice %0 {offsets = [0, 0], sizes = [1, 256], strides = [1, 1]} : vector<10x256xf32> to vector<1x256xf32>
    %48 = vector.broadcast %47 : vector<1x256xf32> to vector<8x256xf32>
    %49 = arith.mulf %46, %48 : vector<8x256xf32>
    %c0_17 = arith.constant 0 : index
    %c256 = arith.constant 256 : index
    %50 = vector.load %arg6[%c0_17, %c256] : memref<72x512xf32, #tpu.memory_space<vmem>>, vector<8x256xf32>
    tpu.vector_store %arg6[%c0_17, %c256], %49 {strides = array<i32>} : memref<72x512xf32, #tpu.memory_space<vmem>>, vector<8x256xf32>,
    %c16_i32_18 = arith.constant 16 : i32
    %51 = tpu.dynamic_rotate %45 by %c16_i32_18 dim 1 : vector<8x256xf32>, i32 -> vector<8x256xf32>
    %52 = vector.extract_strided_slice %0 {offsets = [1, 0], sizes = [1, 256], strides = [1, 1]} : vector<10x256xf32> to vector<1x256xf32>
    %53 = vector.broadcast %52 : vector<1x256xf32> to vector<8x256xf32>
    %54 = arith.mulf %51, %53 : vector<8x256xf32>
    %c8_19 = arith.constant 8 : index
    %c256_20 = arith.constant 256 : index
    %55 = vector.load %arg6[%c8_19, %c256_20] : memref<72x512xf32, #tpu.memory_space<vmem>>, vector<8x256xf32>
    tpu.vector_store %arg6[%c8_19, %c256_20], %54 {strides = array<i32>} : memref<72x512xf32, #tpu.memory_space<vmem>>, vector<8x256xf32>,
    %c15_i32_21 = arith.constant 15 : i32
    %56 = tpu.dynamic_rotate %45 by %c15_i32_21 dim 1 : vector<8x256xf32>, i32 -> vector<8x256xf32>
    %57 = vector.extract_strided_slice %0 {offsets = [2, 0], sizes = [1, 256], strides = [1, 1]} : vector<10x256xf32> to vector<1x256xf32>
    %58 = vector.broadcast %57 : vector<1x256xf32> to vector<8x256xf32>
    %59 = arith.mulf %56, %58 : vector<8x256xf32>
    %c16_22 = arith.constant 16 : index
    %c256_23 = arith.constant 256 : index
    %60 = vector.load %arg6[%c16_22, %c256_23] : memref<72x512xf32, #tpu.memory_space<vmem>>, vector<8x256xf32>
    tpu.vector_store %arg6[%c16_22, %c256_23], %59 {strides = array<i32>} : memref<72x512xf32, #tpu.memory_space<vmem>>, vector<8x256xf32>,
    %c1_i32_24 = arith.constant 1 : i32
    %61 = tpu.dynamic_rotate %45 by %c1_i32_24 dim 1 : vector<8x256xf32>, i32 -> vector<8x256xf32>
    %62 = vector.extract_strided_slice %0 {offsets = [3, 0], sizes = [1, 256], strides = [1, 1]} : vector<10x256xf32> to vector<1x256xf32>
    %63 = vector.broadcast %62 : vector<1x256xf32> to vector<8x256xf32>
    %64 = arith.mulf %61, %63 : vector<8x256xf32>
    %c24_25 = arith.constant 24 : index
    %c256_26 = arith.constant 256 : index
    %65 = vector.load %arg6[%c24_25, %c256_26] : memref<72x512xf32, #tpu.memory_space<vmem>>, vector<8x256xf32>
    tpu.vector_store %arg6[%c24_25, %c256_26], %64 {strides = array<i32>} : memref<72x512xf32, #tpu.memory_space<vmem>>, vector<8x256xf32>,
    %c32_27 = arith.constant 32 : index
    %c256_28 = arith.constant 256 : index
    %66 = vector.load %arg6[%c32_27, %c256_28] : memref<72x512xf32, #tpu.memory_space<vmem>>, vector<8x256xf32>
    tpu.vector_store %arg6[%c32_27, %c256_28], %45 {strides = array<i32>} : memref<72x512xf32, #tpu.memory_space<vmem>>, vector<8x256xf32>,
    %c255_i32_29 = arith.constant 255 : i32
    %67 = tpu.dynamic_rotate %45 by %c255_i32_29 dim 1 : vector<8x256xf32>, i32 -> vector<8x256xf32>
    %68 = vector.extract_strided_slice %0 {offsets = [5, 0], sizes = [1, 256], strides = [1, 1]} : vector<10x256xf32> to vector<1x256xf32>
    %69 = vector.broadcast %68 : vector<1x256xf32> to vector<8x256xf32>
    %70 = arith.mulf %67, %69 : vector<8x256xf32>
    %c40_30 = arith.constant 40 : index
    %c256_31 = arith.constant 256 : index
    %71 = vector.load %arg6[%c40_30, %c256_31] : memref<72x512xf32, #tpu.memory_space<vmem>>, vector<8x256xf32>
    tpu.vector_store %arg6[%c40_30, %c256_31], %70 {strides = array<i32>} : memref<72x512xf32, #tpu.memory_space<vmem>>, vector<8x256xf32>,
    %c241_i32_32 = arith.constant 241 : i32
    %72 = tpu.dynamic_rotate %45 by %c241_i32_32 dim 1 : vector<8x256xf32>, i32 -> vector<8x256xf32>
    %73 = vector.extract_strided_slice %0 {offsets = [6, 0], sizes = [1, 256], strides = [1, 1]} : vector<10x256xf32> to vector<1x256xf32>
    %74 = vector.broadcast %73 : vector<1x256xf32> to vector<8x256xf32>
    %75 = arith.mulf %72, %74 : vector<8x256xf32>
    %c48_33 = arith.constant 48 : index
    %c256_34 = arith.constant 256 : index
    %76 = vector.load %arg6[%c48_33, %c256_34] : memref<72x512xf32, #tpu.memory_space<vmem>>, vector<8x256xf32>
    tpu.vector_store %arg6[%c48_33, %c256_34], %75 {strides = array<i32>} : memref<72x512xf32, #tpu.memory_space<vmem>>, vector<8x256xf32>,
    %c240_i32_35 = arith.constant 240 : i32
    %77 = tpu.dynamic_rotate %45 by %c240_i32_35 dim 1 : vector<8x256xf32>, i32 -> vector<8x256xf32>
    %78 = vector.extract_strided_slice %0 {offsets = [7, 0], sizes = [1, 256], strides = [1, 1]} : vector<10x256xf32> to vector<1x256xf32>
    %79 = vector.broadcast %78 : vector<1x256xf32> to vector<8x256xf32>
    %80 = arith.mulf %77, %79 : vector<8x256xf32>
    %c56_36 = arith.constant 56 : index
    %c256_37 = arith.constant 256 : index
    %81 = vector.load %arg6[%c56_36, %c256_37] : memref<72x512xf32, #tpu.memory_space<vmem>>, vector<8x256xf32>
    tpu.vector_store %arg6[%c56_36, %c256_37], %80 {strides = array<i32>} : memref<72x512xf32, #tpu.memory_space<vmem>>, vector<8x256xf32>,
    %c239_i32_38 = arith.constant 239 : i32
    %82 = tpu.dynamic_rotate %45 by %c239_i32_38 dim 1 : vector<8x256xf32>, i32 -> vector<8x256xf32>
    %83 = vector.extract_strided_slice %0 {offsets = [8, 0], sizes = [1, 256], strides = [1, 1]} : vector<10x256xf32> to vector<1x256xf32>
    %84 = vector.broadcast %83 : vector<1x256xf32> to vector<8x256xf32>
    %85 = arith.mulf %82, %84 : vector<8x256xf32>
    %c64_39 = arith.constant 64 : index
    %c256_40 = arith.constant 256 : index
    %86 = vector.load %arg6[%c64_39, %c256_40] : memref<72x512xf32, #tpu.memory_space<vmem>>, vector<8x256xf32>
    tpu.vector_store %arg6[%c64_39, %c256_40], %85 {strides = array<i32>} : memref<72x512xf32, #tpu.memory_space<vmem>>, vector<8x256xf32>,
    %c0_41 = arith.constant 0 : index
    %c0_42 = arith.constant 0 : index
    %87 = vector.load %arg2[%c0_41, %c0_42] : memref<8x72xf32, #tpu.memory_space<vmem>>, vector<8x72xf32>
    %c0_43 = arith.constant 0 : index
    %c0_44 = arith.constant 0 : index
    %88 = vector.load %arg6[%c0_43, %c0_44] : memref<72x512xf32, #tpu.memory_space<vmem>>, vector<72x512xf32>
    %cst = arith.constant dense<0.000000e+00> : vector<8x512xf32>
    %89 = tpu.matmul %87, %88, %cst {dimension_numbers = #tpu.dot_dimension_numbers<[1], [0], [0], [1], [0, 0, 1, 1], [], []>} : vector<8x72xf32>, vector<72x512xf32>, vector<8x512xf32> -> vector<8x512xf32>
    %c0_45 = arith.constant 0 : index
    %c0_46 = arith.constant 0 : index
    %90 = vector.load %arg3[%c0_45, %c0_46] : memref<8x3xf32, #tpu.memory_space<vmem>>, vector<8x1xf32>
    %91 = vector.broadcast %90 : vector<8x1xf32> to vector<8x512xf32>
    %92 = arith.addf %89, %91 : vector<8x512xf32>
    %c0_47 = arith.constant 0 : index
    %c1_48 = arith.constant 1 : index
    %93 = vector.load %arg3[%c0_47, %c1_48] : memref<8x3xf32, #tpu.memory_space<vmem>>, vector<8x1xf32>
    %c0_49 = arith.constant 0 : index
    %c2 = arith.constant 2 : index
    %94 = vector.load %arg3[%c0_49, %c2] : memref<8x3xf32, #tpu.memory_space<vmem>>, vector<8x1xf32>
    %95 = vector.extract_strided_slice %0 {offsets = [9, 0], sizes = [1, 256], strides = [1, 1]} : vector<10x256xf32> to vector<1x256xf32>
    %96 = vector.extract_strided_slice %92 {offsets = [0, 0], sizes = [8, 256], strides = [1, 1]} : vector<8x512xf32> to vector<8x256xf32>
    %97 = vector.broadcast %95 : vector<1x256xf32> to vector<8x256xf32>
    %98 = arith.mulf %96, %97 : vector<8x256xf32>
    %99 = vector.shape_cast %98 : vector<8x256xf32> to vector<1x8x256xf32>
    %cst_50 = arith.constant dense<0.000000e+00> : vector<1xf32>
    %100 = vector.multi_reduction <add>, %99, %cst_50 [1, 2] : vector<1x8x256xf32> to vector<1xf32>
    %101 = vector.shape_cast %100 : vector<1xf32> to vector<1x1x1xf32>
    %102 = vector.extract %101[0, 0, 0] : f32 from vector<1x1x1xf32>
    %cst_51 = arith.constant 4.8828125E-4 : f32
    %103 = arith.mulf %102, %cst_51 : f32
    %104 = vector.broadcast %103 : f32 to vector<8x256xf32>
    %105 = arith.subf %96, %104 : vector<8x256xf32>
    %106 = vector.broadcast %95 : vector<1x256xf32> to vector<8x256xf32>
    %107 = arith.mulf %105, %106 : vector<8x256xf32>
    %108 = arith.mulf %107, %107 : vector<8x256xf32>
    %109 = vector.shape_cast %108 : vector<8x256xf32> to vector<1x8x256xf32>
    %cst_52 = arith.constant dense<0.000000e+00> : vector<1xf32>
    %110 = vector.multi_reduction <add>, %109, %cst_52 [1, 2] : vector<1x8x256xf32> to vector<1xf32>
    %111 = vector.shape_cast %110 : vector<1xf32> to vector<1x1x1xf32>
    %112 = vector.extract %111[0, 0, 0] : f32 from vector<1x1x1xf32>
    %cst_53 = arith.constant 4.8828125E-4 : f32
    %113 = arith.mulf %112, %cst_53 : f32
    %cst_54 = arith.constant 9.99999974E-6 : f32
    %114 = arith.addf %113, %cst_54 : f32
    %115 = math.rsqrt %114 : f32
    %116 = vector.broadcast %103 : f32 to vector<8x256xf32>
    %117 = arith.subf %96, %116 : vector<8x256xf32>
    %118 = vector.broadcast %115 : f32 to vector<8x256xf32>
    %119 = arith.mulf %117, %118 : vector<8x256xf32>
    %120 = vector.broadcast %93 : vector<8x1xf32> to vector<8x256xf32>
    %121 = arith.mulf %119, %120 : vector<8x256xf32>
    %122 = vector.broadcast %94 : vector<8x1xf32> to vector<8x256xf32>
    %123 = arith.addf %121, %122 : vector<8x256xf32>
    %124 = arith.negf %123 : vector<8x256xf32>
    %125 = math.exp %124 : vector<8x256xf32>
    %cst_55 = arith.constant 1.000000e+00 : f32
    %126 = vector.broadcast %cst_55 : f32 to vector<8x256xf32>
    %127 = arith.addf %126, %125 : vector<8x256xf32>
    %128 = arith.divf %126, %127 : vector<8x256xf32>
    %129 = arith.mulf %123, %128 : vector<8x256xf32>
    %c0_56 = arith.constant 0 : index
    %c0_57 = arith.constant 0 : index
    %c0_58 = arith.constant 0 : index
    %130 = vector.load %arg5[%c0_56, %c0_57, %c0_58] : memref<2x8x256xf32, #tpu.memory_space<vmem>>, vector<1x8x256xf32>
    %131 = vector.shape_cast %130 : vector<1x8x256xf32> to vector<8x256xf32>
    %132 = vector.shape_cast %129 : vector<8x256xf32> to vector<1x8x256xf32>
    tpu.vector_store %arg5[%c0_56, %c0_57, %c0_58], %132 {strides = array<i32>} : memref<2x8x256xf32, #tpu.memory_space<vmem>>, vector<1x8x256xf32>,
    %133 = vector.extract_strided_slice %92 {offsets = [0, 256], sizes = [8, 256], strides = [1, 1]} : vector<8x512xf32> to vector<8x256xf32>
    %134 = vector.broadcast %95 : vector<1x256xf32> to vector<8x256xf32>
    %135 = arith.mulf %133, %134 : vector<8x256xf32>
    %136 = vector.shape_cast %135 : vector<8x256xf32> to vector<1x8x256xf32>
    %cst_59 = arith.constant dense<0.000000e+00> : vector<1xf32>
    %137 = vector.multi_reduction <add>, %136, %cst_59 [1, 2] : vector<1x8x256xf32> to vector<1xf32>
    %138 = vector.shape_cast %137 : vector<1xf32> to vector<1x1x1xf32>
    %139 = vector.extract %138[0, 0, 0] : f32 from vector<1x1x1xf32>
    %cst_60 = arith.constant 4.8828125E-4 : f32
    %140 = arith.mulf %139, %cst_60 : f32
    %141 = vector.broadcast %140 : f32 to vector<8x256xf32>
    %142 = arith.subf %133, %141 : vector<8x256xf32>
    %143 = vector.broadcast %95 : vector<1x256xf32> to vector<8x256xf32>
    %144 = arith.mulf %142, %143 : vector<8x256xf32>
    %145 = arith.mulf %144, %144 : vector<8x256xf32>
    %146 = vector.shape_cast %145 : vector<8x256xf32> to vector<1x8x256xf32>
    %cst_61 = arith.constant dense<0.000000e+00> : vector<1xf32>
    %147 = vector.multi_reduction <add>, %146, %cst_61 [1, 2] : vector<1x8x256xf32> to vector<1xf32>
    %148 = vector.shape_cast %147 : vector<1xf32> to vector<1x1x1xf32>
    %149 = vector.extract %148[0, 0, 0] : f32 from vector<1x1x1xf32>
    %cst_62 = arith.constant 4.8828125E-4 : f32
    %150 = arith.mulf %149, %cst_62 : f32
    %cst_63 = arith.constant 9.99999974E-6 : f32
    %151 = arith.addf %150, %cst_63 : f32
    %152 = math.rsqrt %151 : f32
    %153 = vector.broadcast %140 : f32 to vector<8x256xf32>
    %154 = arith.subf %133, %153 : vector<8x256xf32>
    %155 = vector.broadcast %152 : f32 to vector<8x256xf32>
    %156 = arith.mulf %154, %155 : vector<8x256xf32>
    %157 = vector.broadcast %93 : vector<8x1xf32> to vector<8x256xf32>
    %158 = arith.mulf %156, %157 : vector<8x256xf32>
    %159 = vector.broadcast %94 : vector<8x1xf32> to vector<8x256xf32>
    %160 = arith.addf %158, %159 : vector<8x256xf32>
    %161 = arith.negf %160 : vector<8x256xf32>
    %162 = math.exp %161 : vector<8x256xf32>
    %cst_64 = arith.constant 1.000000e+00 : f32
    %163 = vector.broadcast %cst_64 : f32 to vector<8x256xf32>
    %164 = arith.addf %163, %162 : vector<8x256xf32>
    %165 = arith.divf %163, %164 : vector<8x256xf32>
    %166 = arith.mulf %160, %165 : vector<8x256xf32>
    %c1_65 = arith.constant 1 : index
    %c0_66 = arith.constant 0 : index
    %c0_67 = arith.constant 0 : index
    %167 = vector.load %arg5[%c1_65, %c0_66, %c0_67] : memref<2x8x256xf32, #tpu.memory_space<vmem>>, vector<1x8x256xf32>
    %168 = vector.shape_cast %167 : vector<1x8x256xf32> to vector<8x256xf32>
    %169 = vector.shape_cast %166 : vector<8x256xf32> to vector<1x8x256xf32>
    tpu.vector_store %arg5[%c1_65, %c0_66, %c0_67], %169 {strides = array<i32>} : memref<2x8x256xf32, #tpu.memory_space<vmem>>, vector<1x8x256xf32>,
    return
  }
  func.func @transform_0(%arg0: i32) -> (i32, i32, i32) {
    %c0_i32 = arith.constant 0 : i32
    %c0_i32_0 = arith.constant 0 : i32
    %c0_i32_1 = arith.constant 0 : i32
    return %arg0, %c0_i32, %c0_i32_0 : i32, i32, i32
  }
  func.func @transform_1(%arg0: i32) -> (i32, i32) {
    %c0_i32 = arith.constant 0 : i32
    %c0_i32_0 = arith.constant 0 : i32
    %c0_i32_1 = arith.constant 0 : i32
    return %c0_i32, %c0_i32_0 : i32, i32
  }
  func.func @transform_2(%arg0: i32) -> (i32, i32) {
    %c0_i32 = arith.constant 0 : i32
    %c0_i32_0 = arith.constant 0 : i32
    %c0_i32_1 = arith.constant 0 : i32
    return %c0_i32, %c0_i32_0 : i32, i32
  }
  func.func @transform_3(%arg0: i32) -> (i32, i32) {
    %c0_i32 = arith.constant 0 : i32
    %c0_i32_0 = arith.constant 0 : i32
    %c0_i32_1 = arith.constant 0 : i32
    return %c0_i32, %c0_i32_0 : i32, i32
  }
  func.func @transform_4(%arg0: i32) -> (i32, i32, i32) {
    %c0_i32 = arith.constant 0 : i32
    %c0_i32_0 = arith.constant 0 : i32
    %c0_i32_1 = arith.constant 0 : i32
    return %arg0, %c0_i32, %c0_i32_0 : i32, i32, i32
  }
}

</mosaic_0001>

<llo_original>
// kernel: block_gdiff_2d.1
$region0: #{block_gdiff_2d.1}
  #allocation0 [shape = 'u32[]', space=smem, size = 0x4, offset = 0x4, fixed_abs, tag = 'smem constant byte address 0x4 - core index']
  #allocation1 [shape = 'u32[144,128]{1,0:T(1,128)}', space=vmem, size = 0x12000, scoped, tag = 'internal scratch']
  #allocation2 [shape = 'f32[72,512]{1,0:T(8,128)}', space=vmem, size = 0x24000, scoped, tag = 'scratch operand']
  %s0 = inlined_call_operand.vmem [shape: f32[2,8,256], index: 0, kind: input, shape index: {}]
  %s1 = inlined_call_operand.vmem [shape: f32[8,72], index: 1, kind: input, shape index: {}]
  %s2 = inlined_call_operand.vmem [shape: f32[8,3], index: 2, kind: input, shape index: {}]
  %s3 = inlined_call_operand.vmem [shape: f32[10,256], index: 3, kind: input, shape index: {}]
  %s4 = inlined_call_operand.vmem [shape: f32[2,8,256], index: 4, kind: output, shape index: {}]
  %s5 = sld [smem:[#allocation0]]
  $region26: #{block_gdiff_2d.1} parent=0
    _
  %s7 = ssub.s32 1, %s5
  %s8 = scalar_select 0, %s7, %s5
  // Predicated region
  $region2: #{block_gdiff_2d.1} parent=0 // pred_check
    _
  $region3: #{block_gdiff_2d.1} parent=0 // pred_check_branch
    %10 = sbr.rel (0) target = $region5
  $region4: #{block_gdiff_2d.1} parent=0 // pred_region
    _
  $region5: #{block_gdiff_2d.1} parent=0 // pred_fallthru
    _
  // Predicated region
  $region6: #{block_gdiff_2d.1} parent=0 // pred_check
    _
  $region7: #{block_gdiff_2d.1} parent=0 // pred_check_branch
    %12 = sbr.rel (0) target = $region9
  $region8: #{block_gdiff_2d.1} parent=0 // pred_region
    _
  $region9: #{block_gdiff_2d.1} parent=0 // pred_fallthru
    _
  // Predicated region
  $region10: #{block_gdiff_2d.1} parent=0 // pred_check
    _
  $region11: #{block_gdiff_2d.1} parent=0 // pred_check_branch
    %14 = sbr.rel (0) target = $region13
  $region12: #{block_gdiff_2d.1} parent=0 // pred_region
    _
  $region13: #{block_gdiff_2d.1} parent=0 // pred_fallthru
    _
  // Predicated region
  $region14: #{block_gdiff_2d.1} parent=0 // pred_check
    _
  $region15: #{block_gdiff_2d.1} parent=0 // pred_check_branch
    %16 = sbr.rel (0) target = $region17
  $region16: #{block_gdiff_2d.1} parent=0 // pred_region
    _
  $region17: #{block_gdiff_2d.1} parent=0 // pred_fallthru
    _
  %v17 = vld [vmem:[%s3] sm:$0xff]
  %v18 = vld [vmem:[%s3 + $0x8] sm:$0xff]
  %v19 = vld [vmem:[%s3 + $0x10] sm:$0x3]
  %v20 = vld [vmem:[%s3 + $0x18] sm:$0x3]
  %v21 = vld [vmem:[%s0] sm:$0xff]
  %v22 = vld [vmem:[%s0 + $0x8] sm:$0xff]
  %23 = vrot.lane.b32.xlu0 %v21, 17
  %v24 = vpop.permute.xlu0 %23
  %25 = vrot.lane.b32.xlu0 %v22, 17
  %v26 = vpop.permute.xlu0 %25
  %v27 = vlaneseq
  %v28 = vand.u32 %v27, 127
  %vm29 = vcmp.lt.s32.totalorder %v28, 17
  %v30 = vsel %vm29, %v24, %v26
  %v31 = vsel %vm29, %v26, %v24
  %v32 = vlaneseq
  %v33 = vshrl.u32 %v32, 7
  %v34 = vsub.s32 0, %v33
  %v35 = vrot.slane %v17, %v34
  %v36 = vlaneseq
  %v37 = vshrl.u32 %v36, 7
  %v38 = vsub.s32 0, %v37
  %v39 = vrot.slane %v18, %v38
  %v40 = vmul.f32 %v31, %v35
  %v41 = vmul.f32 %v30, %v39
  %42 = vst [vmem:[#allocation2] sm:$0xff] %v40
  %43 = vst [vmem:[#allocation2 + $0x8] sm:$0xff] %v41
  %44 = vrot.lane.b32.xlu0 %v21, 16
  %v45 = vpop.permute.xlu0 %44
  %46 = vrot.lane.b32.xlu0 %v22, 16
  %v47 = vpop.permute.xlu0 %46
  %vm48 = vcmp.lt.s32.totalorder %v28, 16
  %v49 = vsel %vm48, %v45, %v47
  %v50 = vsel %vm48, %v47, %v45
  %v51 = vlaneseq
  %v52 = vshrl.u32 %v51, 7
  %v53 = vsub.s32 1, %v52
  %v54 = vrot.slane %v17, %v53
  %v55 = vlaneseq
  %v56 = vshrl.u32 %v55, 7
  %v57 = vsub.s32 1, %v56
  %v58 = vrot.slane %v18, %v57
  %v59 = vmul.f32 %v50, %v54
  %v60 = vmul.f32 %v49, %v58
  %61 = vst [vmem:[#allocation2 + $0x20] sm:$0xff] %v59
  %62 = vst [vmem:[#allocation2 + $0x28] sm:$0xff] %v60
  %63 = vrot.lane.b32.xlu0 %v21, 15
  %v64 = vpop.permute.xlu0 %63
  %65 = vrot.lane.b32.xlu0 %v22, 15
  %v66 = vpop.permute.xlu0 %65
  %vm67 = vcmp.lt.s32.totalorder %v28, 15
  %v68 = vsel %vm67, %v64, %v66
  %v69 = vsel %vm67, %v66, %v64
  %v70 = vlaneseq
  %v71 = vshrl.u32 %v70, 7
  %v72 = vsub.s32 2, %v71
  %v73 = vrot.slane %v17, %v72
  %v74 = vlaneseq
  %v75 = vshrl.u32 %v74, 7
  %v76 = vsub.s32 2, %v75
  %v77 = vrot.slane %v18, %v76
  %v78 = vmul.f32 %v69, %v73
  %v79 = vmul.f32 %v68, %v77
  %80 = vst [vmem:[#allocation2 + $0x40] sm:$0xff] %v78
  %81 = vst [vmem:[#allocation2 + $0x48] sm:$0xff] %v79
  %82 = vrot.lane.b32.xlu0 %v21, 1
  %v83 = vpop.permute.xlu0 %82
  %84 = vrot.lane.b32.xlu0 %v22, 1
  %v85 = vpop.permute.xlu0 %84
  %vm86 = vcmp.lt.s32.totalorder %v28, 1
  %v87 = vsel %vm86, %v83, %v85
  %v88 = vsel %vm86, %v85, %v83
  %v89 = vlaneseq
  %v90 = vshrl.u32 %v89, 7
  %v91 = vsub.s32 3, %v90
  %v92 = vrot.slane %v17, %v91
  %v93 = vlaneseq
  %v94 = vshrl.u32 %v93, 7
  %v95 = vsub.s32 3, %v94
  %v96 = vrot.slane %v18, %v95
  %v97 = vmul.f32 %v88, %v92
  %v98 = vmul.f32 %v87, %v96
  %99 = vst [vmem:[#allocation2 + $0x60] sm:$0xff] %v97
  %100 = vst [vmem:[#allocation2 + $0x68] sm:$0xff] %v98
  %101 = vst [vmem:[#allocation2 + $0x80] sm:$0xff] %v21
  %102 = vst [vmem:[#allocation2 + $0x88] sm:$0xff] %v22
  %103 = vrot.lane.b32.xlu0 %v21, 127
  %v104 = vpop.permute.xlu0 %103
  %105 = vrot.lane.b32.xlu0 %v22, 127
  %v106 = vpop.permute.xlu0 %105
  %vm107 = vcmp.lt.s32.totalorder %v28, 127
  %v108 = vsel %vm107, %v104, %v106
  %v109 = vsel %vm107, %v106, %v104
  %v110 = vlaneseq
  %v111 = vshrl.u32 %v110, 7
  %v112 = vsub.s32 5, %v111
  %v113 = vrot.slane %v17, %v112
  %v114 = vlaneseq
  %v115 = vshrl.u32 %v114, 7
  %v116 = vsub.s32 5, %v115
  %v117 = vrot.slane %v18, %v116
  %v118 = vmul.f32 %v108, %v113
  %v119 = vmul.f32 %v109, %v117
  %120 = vst [vmem:[#allocation2 + $0xa0] sm:$0xff] %v118
  %121 = vst [vmem:[#allocation2 + $0xa8] sm:$0xff] %v119
  %122 = vrot.lane.b32.xlu0 %v21, 113
  %v123 = vpop.permute.xlu0 %122
  %124 = vrot.lane.b32.xlu0 %v22, 113
  %v125 = vpop.permute.xlu0 %124
  %vm126 = vcmp.lt.s32.totalorder %v28, 113
  %v127 = vsel %vm126, %v123, %v125
  %v128 = vsel %vm126, %v125, %v123
  %v129 = vlaneseq
  %v130 = vshrl.u32 %v129, 7
  %v131 = vsub.s32 6, %v130
  %v132 = vrot.slane %v17, %v131
  %v133 = vlaneseq
  %v134 = vshrl.u32 %v133, 7
  %v135 = vsub.s32 6, %v134
  %v136 = vrot.slane %v18, %v135
  %v137 = vmul.f32 %v127, %v132
  %v138 = vmul.f32 %v128, %v136
  %139 = vst [vmem:[#allocation2 + $0xc0] sm:$0xff] %v137
  %140 = vst [vmem:[#allocation2 + $0xc8] sm:$0xff] %v138
  %141 = vrot.lane.b32.xlu0 %v21, 112
  %v142 = vpop.permute.xlu0 %141
  %143 = vrot.lane.b32.xlu0 %v22, 112
  %v144 = vpop.permute.xlu0 %143
  %vm145 = vcmp.lt.s32.totalorder %v28, 112
  %v146 = vsel %vm145, %v142, %v144
  %v147 = vsel %vm145, %v144, %v142
  %v148 = vlaneseq
  %v149 = vshrl.u32 %v148, 7
  %v150 = vsub.s32 7, %v149
  %v151 = vrot.slane %v17, %v150
  %v152 = vlaneseq
  %v153 = vshrl.u32 %v152, 7
  %v154 = vsub.s32 7, %v153
  %v155 = vrot.slane %v18, %v154
  %v156 = vmul.f32 %v146, %v151
  %v157 = vmul.f32 %v147, %v155
  %158 = vst [vmem:[#allocation2 + $0xe0] sm:$0xff] %v156
  %159 = vst [vmem:[#allocation2 + $0xe8] sm:$0xff] %v157
  %160 = vrot.lane.b32.xlu0 %v21, 111
  %v161 = vpop.permute.xlu0 %160
  %162 = vrot.lane.b32.xlu0 %v22, 111
  %v163 = vpop.permute.xlu0 %162
  %vm164 = vcmp.lt.s32.totalorder %v28, 111
  %v165 = vsel %vm164, %v161, %v163
  %v166 = vsel %vm164, %v163, %v161
  %v167 = vlaneseq
  %v168 = vshrl.u32 %v167, 7
  %v169 = vsub.s32 0, %v168
  %v170 = vrot.slane %v19, %v169
  %v171 = vlaneseq
  %v172 = vshrl.u32 %v171, 7
  %v173 = vsub.s32 0, %v172
  %v174 = vrot.slane %v20, %v173
  %v175 = vmul.f32 %v165, %v170
  %v176 = vmul.f32 %v166, %v174
  %177 = vst [vmem:[#allocation2 + $0x100] sm:$0xff] %v175
  %178 = vst [vmem:[#allocation2 + $0x108] sm:$0xff] %v176
  %s179 = scalar_lea.vmem %s0, 16
  %v180 = vld [vmem:[%s179] sm:$0xff]
  %v181 = vld [vmem:[%s179 + $0x8] sm:$0xff]
  %182 = vrot.lane.b32.xlu0 %v180, 17
  %v183 = vpop.permute.xlu0 %182
  %184 = vrot.lane.b32.xlu0 %v181, 17
  %v185 = vpop.permute.xlu0 %184
  %v186 = vsel %vm29, %v183, %v185
  %v187 = vsel %vm29, %v185, %v183
  %v188 = vmul.f32 %v187, %v35
  %v189 = vmul.f32 %v186, %v39
  %190 = vst [vmem:[#allocation2 + $0x10] sm:$0xff] %v188
  %191 = vst [vmem:[#allocation2 + $0x18] sm:$0xff] %v189
  %192 = vrot.lane.b32.xlu0 %v180, 16
  %v193 = vpop.permute.xlu0 %192
  %194 = vrot.lane.b32.xlu0 %v181, 16
  %v195 = vpop.permute.xlu0 %194
  %v196 = vsel %vm48, %v193, %v195
  %v197 = vsel %vm48, %v195, %v193
  %v198 = vmul.f32 %v197, %v54
  %v199 = vmul.f32 %v196, %v58
  %200 = vst [vmem:[#allocation2 + $0x30] sm:$0xff] %v198
  %201 = vst [vmem:[#allocation2 + $0x38] sm:$0xff] %v199
  %202 = vrot.lane.b32.xlu0 %v180, 15
  %v203 = vpop.permute.xlu0 %202
  %204 = vrot.lane.b32.xlu0 %v181, 15
  %v205 = vpop.permute.xlu0 %204
  %v206 = vsel %vm67, %v203, %v205
  %v207 = vsel %vm67, %v205, %v203
  %v208 = vmul.f32 %v207, %v73
  %v209 = vmul.f32 %v206, %v77
  %210 = vst [vmem:[#allocation2 + $0x50] sm:$0xff] %v208
  %211 = vst [vmem:[#allocation2 + $0x58] sm:$0xff] %v209
  %212 = vrot.lane.b32.xlu0 %v180, 1
  %v213 = vpop.permute.xlu0 %212
  %214 = vrot.lane.b32.xlu0 %v181, 1
  %v215 = vpop.permute.xlu0 %214
  %v216 = vsel %vm86, %v213, %v215
  %v217 = vsel %vm86, %v215, %v213
  %v218 = vmul.f32 %v217, %v92
  %v219 = vmul.f32 %v216, %v96
  %220 = vst [vmem:[#allocation2 + $0x70] sm:$0xff] %v218
  %221 = vst [vmem:[#allocation2 + $0x78] sm:$0xff] %v219
  %222 = vst [vmem:[#allocation2 + $0x90] sm:$0xff] %v180
  %223 = vst [vmem:[#allocation2 + $0x98] sm:$0xff] %v181
  %224 = vrot.lane.b32.xlu0 %v180, 127
  %v225 = vpop.permute.xlu0 %224
  %226 = vrot.lane.b32.xlu0 %v181, 127
  %v227 = vpop.permute.xlu0 %226
  %v228 = vsel %vm107, %v225, %v227
  %v229 = vsel %vm107, %v227, %v225
  %v230 = vmul.f32 %v228, %v113
  %v231 = vmul.f32 %v229, %v117
  %232 = vst [vmem:[#allocation2 + $0xb0] sm:$0xff] %v230
  %233 = vst [vmem:[#allocation2 + $0xb8] sm:$0xff] %v231
  %234 = vrot.lane.b32.xlu0 %v180, 113
  %v235 = vpop.permute.xlu0 %234
  %236 = vrot.lane.b32.xlu0 %v181, 113
  %v237 = vpop.permute.xlu0 %236
  %v238 = vsel %vm126, %v235, %v237
  %v239 = vsel %vm126, %v237, %v235
  %v240 = vmul.f32 %v238, %v132
  %v241 = vmul.f32 %v239, %v136
  %242 = vst [vmem:[#allocation2 + $0xd0] sm:$0xff] %v240
  %243 = vst [vmem:[#allocation2 + $0xd8] sm:$0xff] %v241
  %244 = vrot.lane.b32.xlu0 %v180, 112
  %v245 = vpop.permute.xlu0 %244
  %246 = vrot.lane.b32.xlu0 %v181, 112
  %v247 = vpop.permute.xlu0 %246
  %v248 = vsel %vm145, %v245, %v247
  %v249 = vsel %vm145, %v247, %v245
  %v250 = vmul.f32 %v248, %v151
  %v251 = vmul.f32 %v249, %v155
  %252 = vst [vmem:[#allocation2 + $0xf0] sm:$0xff] %v250
  %253 = vst [vmem:[#allocation2 + $0xf8] sm:$0xff] %v251
  %254 = vrot.lane.b32.xlu0 %v180, 111
  %v255 = vpop.permute.xlu0 %254
  %256 = vrot.lane.b32.xlu0 %v181, 111
  %v257 = vpop.permute.xlu0 %256
  %v258 = vsel %vm164, %v255, %v257
  %v259 = vsel %vm164, %v257, %v255
  %v260 = vmul.f32 %v258, %v170
  %v261 = vmul.f32 %v259, %v174
  %262 = vst [vmem:[#allocation2 + $0x110] sm:$0xff] %v260
  %263 = vst [vmem:[#allocation2 + $0x118] sm:$0xff] %v261
  %v264 = vld [vmem:[%s1] sm:$0xff]
  %v265 = vld [vmem:[#allocation2] sm:$0xff]
  %v266 = vld [vmem:[#allocation2 + $0x8] sm:$0xff]
  %v267 = vld [vmem:[#allocation2 + $0x10] sm:$0xff]
  %v268 = vld [vmem:[#allocation2 + $0x18] sm:$0xff]
  %v269 = vld [vmem:[#allocation2 + $0x20] sm:$0xff]
  %v270 = vld [vmem:[#allocation2 + $0x28] sm:$0xff]
  %v271 = vld [vmem:[#allocation2 + $0x30] sm:$0xff]
  %v272 = vld [vmem:[#allocation2 + $0x38] sm:$0xff]
  %v273 = vld [vmem:[#allocation2 + $0x40] sm:$0xff]
  %v274 = vld [vmem:[#allocation2 + $0x48] sm:$0xff]
  %v275 = vld [vmem:[#allocation2 + $0x50] sm:$0xff]
  %v276 = vld [vmem:[#allocation2 + $0x58] sm:$0xff]
  %v277 = vld [vmem:[#allocation2 + $0x60] sm:$0xff]
  %v278 = vld [vmem:[#allocation2 + $0x68] sm:$0xff]
  %v279 = vld [vmem:[#allocation2 + $0x70] sm:$0xff]
  %v280 = vld [vmem:[#allocation2 + $0x78] sm:$0xff]
  %v281 = vld [vmem:[#allocation2 + $0x80] sm:$0xff]
  %v282 = vld [vmem:[#allocation2 + $0x88] sm:$0xff]
  %v283 = vld [vmem:[#allocation2 + $0x90] sm:$0xff]
  %v284 = vld [vmem:[#allocation2 + $0x98] sm:$0xff]
  %v285 = vld [vmem:[#allocation2 + $0xa0] sm:$0xff]
  %v286 = vld [vmem:[#allocation2 + $0xa8] sm:$0xff]
  %v287 = vld [vmem:[#allocation2 + $0xb0] sm:$0xff]
  %v288 = vld [vmem:[#allocation2 + $0xb8] sm:$0xff]
  %v289 = vld [vmem:[#allocation2 + $0xc0] sm:$0xff]
  %v290 = vld [vmem:[#allocation2 + $0xc8] sm:$0xff]
  %v291 = vld [vmem:[#allocation2 + $0xd0] sm:$0xff]
  %v292 = vld [vmem:[#allocation2 + $0xd8] sm:$0xff]
  %v293 = vld [vmem:[#allocation2 + $0xe0] sm:$0xff]
  %v294 = vld [vmem:[#allocation2 + $0xe8] sm:$0xff]
  %v295 = vld [vmem:[#allocation2 + $0xf0] sm:$0xff]
  %v296 = vld [vmem:[#allocation2 + $0xf8] sm:$0xff]
  %v297 = vld [vmem:[#allocation2 + $0x100] sm:$0xff]
  %v298 = vld [vmem:[#allocation2 + $0x108] sm:$0xff]
  %v299 = vld [vmem:[#allocation2 + $0x110] sm:$0xff]
  %v300 = vld [vmem:[#allocation2 + $0x118] sm:$0xff]
  %v301 = vld [vmem:[%s2] sm:$0xff]
  %303 = vset.pattern.permute.xlu0 0
  %304 = vperm.xlu0 %303, %v301
  %v305 = vpop.permute.xlu0 %304
  %vm307 = vcmask 588800
  %v309 = vsel %vm307, %v264, 0
  %311 = vmatprep.subr.mxu0 0.0
  %312 = vmatpush1.msra.mxu0 0.0
  %313 = vmatprep.subr.mxu0 0.0
  %314 = vmatpush1.msra.mxu0 0.0
  %315 = vmatprep.subr.mxu0 0.0
  %316 = vmatpush1.msra.mxu0 0.0
  %317 = vmatprep.subr.mxu0 0.0
  %318 = vmatpush1.msra.mxu0 0.0
  %319 = vmatprep.subr.mxu0 0.0
  %320 = vmatpush1.msra.mxu0 0.0
  %321 = vmatprep.subr.mxu0 0.0
  %322 = vmatpush1.msra.mxu0 0.0
  %323 = vmatprep.subr.mxu0 0.0
  %324 = vmatpush1.msra.mxu0 0.0
  %325 = vmatprep.subr.mxu0 %v298
  %326 = vmatpush1.msra.mxu0 %v297
  %327 = vmatprep.subr.mxu0 %v294
  %328 = vmatpush1.msra.mxu0 %v293
  %329 = vmatprep.subr.mxu0 %v290
  %330 = vmatpush1.msra.mxu0 %v289
  %331 = vmatprep.subr.mxu0 %v286
  %332 = vmatpush1.msra.mxu0 %v285
  %333 = vmatprep.subr.mxu0 %v282
  %334 = vmatpush1.msra.mxu0 %v281
  %335 = vmatprep.subr.mxu0 %v278
  %336 = vmatpush1.msra.mxu0 %v277
  %337 = vmatprep.subr.mxu0 %v274
  %338 = vmatpush1.msra.mxu0 %v273
  %339 = vmatprep.subr.mxu0 %v270
  %340 = vmatpush1.msra.mxu0 %v269
  %341 = vmatprep.subr.mxu0 %v266
  %342 = vmatpush1.msra.mxu0 %v265
  %343 = vmatprep.subr.mxu0 0.0
  %344 = vmatpush2.msra.mxu0 0.0
  %345 = vmatprep.subr.mxu0 0.0
  %346 = vmatpush2.msra.mxu0 0.0
  %347 = vmatprep.subr.mxu0 0.0
  %348 = vmatpush2.msra.mxu0 0.0
  %349 = vmatprep.subr.mxu0 0.0
  %350 = vmatpush2.msra.mxu0 0.0
  %351 = vmatprep.subr.mxu0 0.0
  %352 = vmatpush2.msra.mxu0 0.0
  %353 = vmatprep.subr.mxu0 0.0
  %354 = vmatpush2.msra.mxu0 0.0
  %355 = vmatprep.subr.mxu0 0.0
  %356 = vmatpush2.msra.mxu0 0.0
  %357 = vmatprep.subr.mxu0 0.0
  %358 = vmatpush2.msra.mxu0 0.0
  %359 = vmatprep.subr.mxu0 0.0
  %360 = vmatpush2.msra.mxu0 0.0
  %361 = vmatprep.subr.mxu0 0.0
  %362 = vmatpush2.msra.mxu0 0.0
  %363 = vmatprep.subr.mxu0 0.0
  %364 = vmatpush2.msra.mxu0 0.0
  %365 = vmatprep.subr.mxu0 0.0
  %366 = vmatpush2.msra.mxu0 0.0
  %367 = vmatprep.subr.mxu0 0.0
  %368 = vmatpush2.msra.mxu0 0.0
  %369 = vmatprep.subr.mxu0 0.0
  %370 = vmatpush2.msra.mxu0 0.0
  %371 = vmatprep.subr.mxu0 0.0
  %372 = vmatpush2.msra.mxu0 0.0
  %373 = vmatprep.subr.mxu0 0.0
  %374 = vmatpush2.msra.mxu0 0.0
  %375 = vmatprep.mubr.f32.mxu0 0.0
  %376 = vmatmul.mubr.f32.gmra.mxu0 %v309
  %v377 = vpop.f32.mrf.mxu0
  %v378 = vadd.f32 %v305, %v377
  %v379 = vpop.f32.mrf.mxu0
  %v380 = vadd.f32 %v305, %v379
  %381 = vdwg.mxu0
  %382 = vmatprep.subr.mxu0 0.0
  %383 = vmatpush1.msra.mxu0 0.0
  %384 = vmatprep.subr.mxu0 0.0
  %385 = vmatpush1.msra.mxu0 0.0
  %386 = vmatprep.subr.mxu0 0.0
  %387 = vmatpush1.msra.mxu0 0.0
  %388 = vmatprep.subr.mxu0 0.0
  %389 = vmatpush1.msra.mxu0 0.0
  %390 = vmatprep.subr.mxu0 0.0
  %391 = vmatpush1.msra.mxu0 0.0
  %392 = vmatprep.subr.mxu0 0.0
  %393 = vmatpush1.msra.mxu0 0.0
  %394 = vmatprep.subr.mxu0 0.0
  %395 = vmatpush1.msra.mxu0 0.0
  %396 = vmatprep.subr.mxu0 %v300
  %397 = vmatpush1.msra.mxu0 %v299
  %398 = vmatprep.subr.mxu0 %v296
  %399 = vmatpush1.msra.mxu0 %v295
  %400 = vmatprep.subr.mxu0 %v292
  %401 = vmatpush1.msra.mxu0 %v291
  %402 = vmatprep.subr.mxu0 %v288
  %403 = vmatpush1.msra.mxu0 %v287
  %404 = vmatprep.subr.mxu0 %v284
  %405 = vmatpush1.msra.mxu0 %v283
  %406 = vmatprep.subr.mxu0 %v280
  %407 = vmatpush1.msra.mxu0 %v279
  %408 = vmatprep.subr.mxu0 %v276
  %409 = vmatpush1.msra.mxu0 %v275
  %410 = vmatprep.subr.mxu0 %v272
  %411 = vmatpush1.msra.mxu0 %v271
  %412 = vmatprep.subr.mxu0 %v268
  %413 = vmatpush1.msra.mxu0 %v267
  %414 = vmatprep.subr.mxu0 0.0
  %415 = vmatpush2.msra.mxu0 0.0
  %416 = vmatprep.subr.mxu0 0.0
  %417 = vmatpush2.msra.mxu0 0.0
  %418 = vmatprep.subr.mxu0 0.0
  %419 = vmatpush2.msra.mxu0 0.0
  %420 = vmatprep.subr.mxu0 0.0
  %421 = vmatpush2.msra.mxu0 0.0
  %422 = vmatprep.subr.mxu0 0.0
  %423 = vmatpush2.msra.mxu0 0.0
  %424 = vmatprep.subr.mxu0 0.0
  %425 = vmatpush2.msra.mxu0 0.0
  %426 = vmatprep.subr.mxu0 0.0
  %427 = vmatpush2.msra.mxu0 0.0
  %428 = vmatprep.subr.mxu0 0.0
  %429 = vmatpush2.msra.mxu0 0.0
  %430 = vmatprep.subr.mxu0 0.0
  %431 = vmatpush2.msra.mxu0 0.0
  %432 = vmatprep.subr.mxu0 0.0
  %433 = vmatpush2.msra.mxu0 0.0
  %434 = vmatprep.subr.mxu0 0.0
  %435 = vmatpush2.msra.mxu0 0.0
  %436 = vmatprep.subr.mxu0 0.0
  %437 = vmatpush2.msra.mxu0 0.0
  %438 = vmatprep.subr.mxu0 0.0
  %439 = vmatpush2.msra.mxu0 0.0
  %440 = vmatprep.subr.mxu0 0.0
  %441 = vmatpush2.msra.mxu0 0.0
  %442 = vmatprep.subr.mxu0 0.0
  %443 = vmatpush2.msra.mxu0 0.0
  %444 = vmatprep.subr.mxu0 0.0
  %445 = vmatpush2.msra.mxu0 0.0
  %446 = vmatprep.mubr.f32.mxu0 0.0
  %447 = vmatmul.mubr.f32.gmra.mxu0 %v309
  %v448 = vpop.f32.mrf.mxu0
  %v449 = vadd.f32 %v305, %v448
  %v450 = vpop.f32.mrf.mxu0
  %v451 = vadd.f32 %v305, %v450
  %452 = vdwg.mxu0
  %v453 = vlaneseq
  %v454 = vshrl.u32 %v453, 7
  %v455 = vsub.s32 1, %v454
  %v456 = vrot.slane %v19, %v455
  %v457 = vlaneseq
  %v458 = vshrl.u32 %v457, 7
  %v459 = vsub.s32 1, %v458
  %v460 = vrot.slane %v20, %v459
  %v461 = vmul.f32 %v378, %v456
  %v462 = vmul.f32 %v380, %v460
  %v463 = vadd.f32 %v461, %v462
  %464 = vadd.xlane.f32.xlu0 %v463
  %v465 = vpop.xlane.xlu0 %464
  %v466 = vrot.slane %v465, 4
  %v467 = vadd.f32 %v465, %v466
  %v468 = vrot.slane %v467, 2
  %v469 = vadd.f32 %v467, %v468
  %v470 = vrot.slane %v469, 1
  %v471 = vadd.f32 %v469, %v470
  %s472 = vtos %v471
  %s473 = smul.f32 %s472, 0.00048828125
  %v474 = vstv %s473
  %v475 = vsub.f32 %v378, %v474
  %v476 = vsub.f32 %v380, %v474
  %v477 = vmul.f32 %v475, %v456
  %v478 = vmul.f32 %v476, %v460
  %v479 = vmul.f32 %v477, %v477
  %v480 = vmul.f32 %v478, %v478
  %v481 = vadd.f32 %v479, %v480
  %482 = vadd.xlane.f32.xlu0 %v481
  %v483 = vpop.xlane.xlu0 %482
  %v484 = vrot.slane %v483, 4
  %v485 = vadd.f32 %v483, %v484
  %v486 = vrot.slane %v485, 2
  %v487 = vadd.f32 %v485, %v486
  %v488 = vrot.slane %v487, 1
  %v489 = vadd.f32 %v487, %v488
  %s490 = vtos %v489
  %s491 = smul.f32 %s490, 0.00048828125
  %s492 = sadd.f32 %s491, 1e-05
  %v493 = vstv %s492
  %v494 = vrsqrt.pop %v493
  %s495 = vtos %v494
  %v496 = vstv %s495
  %v497 = vmul.f32 %v475, %v496
  %v498 = vmul.f32 %v476, %v496
  %499 = vset.pattern.permute.xlu0 1
  %500 = vperm.xlu0 %499, %v301
  %v501 = vpop.permute.xlu0 %500
  %v503 = vmul.f32 %v497, %v501
  %v504 = vmul.f32 %v498, %v501
  %505 = vset.pattern.permute.xlu0 2
  %506 = vperm.xlu0 %505, %v301
  %v507 = vpop.permute.xlu0 %506
  %v509 = vadd.f32 %v503, %v507
  %v510 = vadd.f32 %v504, %v507
  %v511 = vxor.u32 %v509, 2147483648
  %v512 = vxor.u32 %v510, 2147483648
  %v513 = vmul.f32 %v511, 1.442695
  %v514 = vpow.pop %v513
  %v515 = vmul.f32 %v512, 1.442695
  %v516 = vpow.pop %v515
  %v517 = vadd.f32 %v514, 1.0
  %v518 = vadd.f32 %v516, 1.0
  %v519 = vrcp.pop %v517
  %v520 = vmul.f32 1.0, %v519
  %v521 = vrcp.pop %v518
  %v522 = vmul.f32 1.0, %v521
  %v523 = vmul.f32 %v509, %v520
  %v524 = vmul.f32 %v510, %v522
  %525 = vst [vmem:[%s4] sm:$0xff] %v523
  %526 = vst [vmem:[%s4 + $0x8] sm:$0xff] %v524
  %v527 = vmul.f32 %v449, %v456
  %v528 = vmul.f32 %v451, %v460
  %v529 = vadd.f32 %v527, %v528
  %530 = vadd.xlane.f32.xlu0 %v529
  %v531 = vpop.xlane.xlu0 %530
  %v532 = vrot.slane %v531, 4
  %v533 = vadd.f32 %v531, %v532
  %v534 = vrot.slane %v533, 2
  %v535 = vadd.f32 %v533, %v534
  %v536 = vrot.slane %v535, 1
  %v537 = vadd.f32 %v535, %v536
  %s538 = vtos %v537
  %s539 = smul.f32 %s538, 0.00048828125
  %v540 = vstv %s539
  %v541 = vsub.f32 %v449, %v540
  %v542 = vsub.f32 %v451, %v540
  %v543 = vmul.f32 %v541, %v456
  %v544 = vmul.f32 %v542, %v460
  %v545 = vmul.f32 %v543, %v543
  %v546 = vmul.f32 %v544, %v544
  %v547 = vadd.f32 %v545, %v546
  %548 = vadd.xlane.f32.xlu0 %v547
  %v549 = vpop.xlane.xlu0 %548
  %v550 = vrot.slane %v549, 4
  %v551 = vadd.f32 %v549, %v550
  %v552 = vrot.slane %v551, 2
  %v553 = vadd.f32 %v551, %v552
  %v554 = vrot.slane %v553, 1
  %v555 = vadd.f32 %v553, %v554
  %s556 = vtos %v555
  %s557 = smul.f32 %s556, 0.00048828125
  %s558 = sadd.f32 %s557, 1e-05
  %v559 = vstv %s558
  %v560 = vrsqrt.pop %v559
  %s561 = vtos %v560
  %v562 = vstv %s561
  %v563 = vmul.f32 %v541, %v562
  %v564 = vmul.f32 %v542, %v562
  %v565 = vmul.f32 %v563, %v501
  %v566 = vmul.f32 %v564, %v501
  %v567 = vadd.f32 %v565, %v507
  %v568 = vadd.f32 %v566, %v507
  %v569 = vxor.u32 %v567, 2147483648
  %v570 = vxor.u32 %v568, 2147483648
  %v571 = vmul.f32 %v569, 1.442695
  %v572 = vpow.pop %v571
  %v573 = vmul.f32 %v570, 1.442695
  %v574 = vpow.pop %v573
  %v575 = vadd.f32 %v572, 1.0
  %v576 = vadd.f32 %v574, 1.0
  %v577 = vrcp.pop %v575
  %v578 = vmul.f32 1.0, %v577
  %v579 = vrcp.pop %v576
  %v580 = vmul.f32 1.0, %v579
  %v581 = vmul.f32 %v567, %v578
  %v582 = vmul.f32 %v568, %v580
  %s583 = scalar_lea.vmem %s4, 16
  %584 = vst [vmem:[%s583] sm:$0xff] %v581
  %585 = vst [vmem:[%s583 + $0x8] sm:$0xff] %v582
  // Predicated region
  $region18: #{block_gdiff_2d.1} parent=0 // pred_check
    _
  $region19: #{block_gdiff_2d.1} parent=0 // pred_check_branch
    %587 = sbr.rel (0) target = $region21
  $region20: #{block_gdiff_2d.1} parent=0 // pred_region
    _
  $region21: #{block_gdiff_2d.1} parent=0 // pred_fallthru
    _
  // Predicated region
  $region22: #{block_gdiff_2d.1} parent=0 // pred_check
    _
  $region23: #{block_gdiff_2d.1} parent=0 // pred_check_branch
    %589 = sbr.rel (0) target = $region25
  $region24: #{block_gdiff_2d.1} parent=0 // pred_region
    _
  $region25: #{block_gdiff_2d.1} parent=0 // pred_fallthru
    _

</llo_original>
